<compile_context>
chip_gen: v5e
topology: v5e:2x2
jax: 0.10.0
libtpu: 0.0.40
codegen_flags: <defaults>
</compile_context>

<pallas_src>
import math

import jax
import jax.numpy as jnp
from jax.experimental import pallas as pl
from jax.experimental.pallas import tpu as pltpu

_MIB = 1024 * 1024


def _swiglu_kernel(x_ref, wcat_ref, bcat_ref, beta_ref, o_ref, acc_ref):
    k = pl.program_id(2)

    @pl.when(k == 0)
    def _():
        # Bias folded into the accumulator init: acc starts at [bg | b].
        acc_ref[...] = jnp.broadcast_to(
            bcat_ref[...].astype(jnp.float32), acc_ref.shape
        )

    # Single MXU contraction producing [gate | value] columns for this tile.
    acc_ref[...] += jnp.dot(
        x_ref[...], wcat_ref[...], preferred_element_type=jnp.float32
    )

    @pl.when(k == pl.num_programs(2) - 1)
    def _():
        tn = o_ref.shape[1]
        g = acc_ref[:, :tn]          # gate branch:  x @ Wg + bg   (f32)
        v = acc_ref[:, tn:]          # value branch: x @ W  + b    (f32)
        beta = beta_ref[0, 0]        # scalar from SMEM
        swish = g * jax.nn.sigmoid(beta * g)   # f32 epilogue (v5e-safe)
        o_ref[...] = (swish * v).astype(o_ref.dtype)


def swiglu_config(M, D, Dout, dtype):
    """Per-chip tile / VMEM-limit selection. Call once (hoist out of fwd)."""
    try:
        vmem_cap = int(pltpu.get_tpu_info().vmem_capacity_bytes)
    except Exception:
        vmem_cap = 64 * _MIB  # conservative fallback (v7x-sized)

    if vmem_cap >= 100 * _MIB:
        # v5e / v6e: 128 MiB VMEM — big M tile to cut weight re-streaming.
        tm, tn, tk = 768, 512, 512
        vmem_limit = 100 * _MIB
    else:
        # v7x (64 MiB VMEM) or unknown: keep the working set well under 48 MiB.
        tm, tn, tk = 512, 512, 512
        vmem_limit = 48 * _MIB

    # Clamp tiles to tiny problem sizes (demo shapes); production shapes keep
    # the 256-aligned defaults above.
    if Dout % tn != 0:
        tn = Dout
    if D % tk != 0:
        tk = D

    # Ragged-M clamp, dtype-aware: 8 sublanes for 32-bit, 16 for 16-bit,
    # 32 for 8-bit packing.
    sub = {4: 8, 2: 16, 1: 32}.get(jnp.dtype(dtype).itemsize, 8)
    tm = min(tm, -(-M // sub) * sub)

    # Keep the parallel grid non-degenerate for v7x's 2 TensorCores: if the M
    # axis collapses to one block, split the N axis when alignment allows.
    Mp = -(-M // tm) * tm
    if Mp // tm == 1 and Dout // tn == 1 and Dout % 512 == 0:
        tn = Dout // 2

    return dict(tm=tm, tn=tn, tk=tk, vmem_limit=vmem_limit)


def pack_swiglu_params(wg, bg, w, b, tn):
    """Column-block-interleave [Wg|W] and [bg|b] with block width tn.

    Do this ONCE at parameter init (not per forward call): it is a full
    2*D^2 HBM read+write.
    """
    def pack(a, bb):
        rows, cols = a.shape
        nj = cols // tn
        stacked = jnp.stack(
            [a.reshape(rows, nj, tn), bb.reshape(rows, nj, tn)], axis=2
        )  # [rows, nj, 2, tn]
        return stacked.reshape(rows, nj * 2 * tn)

    return pack(wg, w), pack(bg, b)


def swiglu_packed(x, wcat, bcat, beta, *, tm, tn, tk, vmem_limit):
    """SwiGLU forward with pre-packed weights.

    x    : [..., D]
    wcat : [D, 2*Dout]  (block-interleaved [Wg|W], block width tn)
    bcat : [1, 2*Dout]
    beta : [1, 1]
    """
    orig_shape = x.shape
    D = orig_shape[-1]
    Dout = wcat.shape[1] // 2
    x2 = x.reshape(-1, D)
    M = x2.shape[0]

    # Pad M up to a multiple of tm only when ragged; padded rows are sliced
    # off afterwards.
    Mp = -(-M // tm) * tm
    if Mp != M:
        x2 = jnp.pad(x2, ((0, Mp - M), (0, 0)))

    grid = (Mp // tm, Dout // tn, D // tk)

    out = pl.pallas_call(
        _swiglu_kernel,
        out_shape=jax.ShapeDtypeStruct((Mp, Dout), x.dtype),
        grid_spec=pltpu.PrefetchScalarGridSpec(
            num_scalar_prefetch=0,
            grid=grid,
            in_specs=[
                pl.BlockSpec((tm, tk), lambda i, j, k: (i, k)),       # x tile
                pl.BlockSpec((tk, 2 * tn), lambda i, j, k: (k, j)),   # [Wg|W]
                pl.BlockSpec((1, 2 * tn), lambda i, j, k: (0, j)),    # [bg|b]
                pl.BlockSpec(memory_space=pltpu.MemorySpace.SMEM),    # beta
            ],
            out_specs=pl.BlockSpec((tm, tn), lambda i, j, k: (i, j)),
            scratch_shapes=[pltpu.VMEM((tm, 2 * tn), jnp.float32)],
        ),
        compiler_params=pltpu.CompilerParams(
            dimension_semantics=("parallel", "parallel", "arbitrary"),
            vmem_limit_bytes=vmem_limit,
        ),
    )(x2, wcat, bcat, beta)

    if Mp != M:
        out = out[:M]
    return out.reshape(orig_shape[:-1] + (Dout,))


def swiglu(x, wg, bg, w, b, beta):
    """Convenience one-shot wrapper (packs per call; prefer the hoisted path:
    swiglu_config + pack_swiglu_params once, then swiglu_packed per call)."""
    D = x.shape[-1]
    Dout = wg.shape[1]
    M = math.prod(x.shape[:-1])
    cfg = swiglu_config(M, D, Dout, x.dtype)
    wcat, bcat = pack_swiglu_params(wg, bg, w, b, cfg["tn"])
    return swiglu_packed(x, wcat, bcat, beta, **cfg)


def swiglu_ref(x, wg, bg, w, b, beta):
    gated = x @ wg + bg
    lin = x @ w + b
    return (gated * jax.nn.sigmoid(beta[0, 0] * gated)) * lin


if __name__ == "__main__":
    key = jax.random.PRNGKey(0)
    B, S, D = 2, 8, 32  # batch, seq, hidden size

    kx, kwg, kbg, kw, kb = jax.random.split(key, 5)

    x = jax.random.normal(kx, (B, S, D), dtype=jnp.float32)

    # Deterministic parameter init (synthetic; mimics Linear(size, size)).
    # PyTorch stores Linear weight as [out, in]; we store transposed [in, out].
    bound = 1.0 / jnp.sqrt(D)
    wg = jax.random.uniform(kwg, (D, D), jnp.float32, -bound, bound)
    bg = jax.random.uniform(kbg, (1, D), jnp.float32, -bound, bound)
    w = jax.random.uniform(kw, (D, D), jnp.float32, -bound, bound)
    b = jax.random.uniform(kb, (1, D), jnp.float32, -bound, bound)
    beta = jnp.ones((1, 1), dtype=jnp.float32)  # nn.Parameter(torch.ones(1))

    # Hoisted path: config + weight packing happen once (init time), only the
    # pallas_call runs per forward.
    M = B * S
    cfg = swiglu_config(M, D, D, x.dtype)
    wcat, bcat = pack_swiglu_params(wg, bg, w, b, cfg["tn"])

    out = swiglu_packed(x, wcat, bcat, beta, **cfg)
    jax.block_until_ready(out)

    ref = swiglu_ref(x.reshape(M, D), wg, bg, w, b, beta).reshape(B, S, D)
    assert jnp.allclose(out, ref, atol=1e-5, rtol=1e-5), "mismatch vs reference"

    print("KERNEL_OK")
</pallas_src>

<mosaic_0001>
module attributes {stable_mosaic.version = 11 : i64} {
  func.func @_swiglu_kernel(%arg0: i32, %arg1: i32, %arg2: i32, %arg3: memref<16x32xf32, #tpu.memory_space<vmem>>, %arg4: memref<32x64xf32, #tpu.memory_space<vmem>>, %arg5: memref<1x64xf32, #tpu.memory_space<vmem>>, %arg6: memref<1x1xf32, #tpu.memory_space<smem>>, %arg7: memref<16x32xf32, #tpu.memory_space<vmem>>, %arg8: memref<16x64xf32, #tpu.memory_space<vmem>>) attributes {dimension_semantics = [#tpu.dimension_semantics<parallel>, #tpu.dimension_semantics<parallel>, #tpu.dimension_semantics<arbitrary>], iteration_bounds = array<i64: 1, 1, 1>, scalar_prefetch = 0 : i64, scratch_operands = 1 : i64, tpu.core_type = #tpu.core_type<tc>, window_params = [{transform_indices = @transform_0, window_bounds = array<i64: 16, 32>}, {transform_indices = @transform_1, window_bounds = array<i64: 32, 64>}, {transform_indices = @transform_2, window_bounds = array<i64: 1, 64>}, {transform_indices = @transform_3, window_bounds = array<i64: 1, 1>}, {transform_indices = @transform_4, window_bounds = array<i64: 16, 32>}]} {
    %c0_i32 = arith.constant 0 : i32
    %0 = arith.cmpi eq, %arg2, %c0_i32 : i32
    %1 = arith.extui %0 : i1 to i32
    %c0_i32_0 = arith.constant 0 : i32
    %2 = arith.cmpi ne, %1, %c0_i32_0 : i32
    scf.if %2 {
      %c0_10 = arith.constant 0 : index
      %c0_11 = arith.constant 0 : index
      %12 = vector.load %arg5[%c0_10, %c0_11] : memref<1x64xf32, #tpu.memory_space<vmem>>, vector<1x64xf32>
      %13 = vector.shape_cast %12 : vector<1x64xf32> to vector<1x64xf32>
      %14 = vector.broadcast %13 : vector<1x64xf32> to vector<16x64xf32>
      %c0_12 = arith.constant 0 : index
      %c0_13 = arith.constant 0 : index
      %15 = vector.load %arg8[%c0_12, %c0_13] : memref<16x64xf32, #tpu.memory_space<vmem>>, vector<16x64xf32>
      tpu.vector_store %arg8[%c0_12, %c0_13], %14 {strides = array<i32>} : memref<16x64xf32, #tpu.memory_space<vmem>>, vector<16x64xf32>,
    } else {
    }
    %c0 = arith.constant 0 : index
    %c0_1 = arith.constant 0 : index
    %3 = vector.load %arg8[%c0, %c0_1] : memref<16x64xf32, #tpu.memory_space<vmem>>, vector<16x64xf32>
    %c0_2 = arith.constant 0 : index
    %c0_3 = arith.constant 0 : index
    %4 = vector.load %arg3[%c0_2, %c0_3] : memref<16x32xf32, #tpu.memory_space<vmem>>, vector<16x32xf32>
    %c0_4 = arith.constant 0 : index
    %c0_5 = arith.constant 0 : index
    %5 = vector.load %arg4[%c0_4, %c0_5] : memref<32x64xf32, #tpu.memory_space<vmem>>, vector<32x64xf32>
    %cst = arith.constant dense<0.000000e+00> : vector<16x64xf32>
    %6 = tpu.matmul %4, %5, %cst {dimension_numbers = #tpu.dot_dimension_numbers<[1], [0], [0], [1], [0, 0, 1, 1], [], []>} : vector<16x32xf32>, vector<32x64xf32>, vector<16x64xf32> -> vector<16x64xf32>
    %7 = arith.addf %3, %6 : vector<16x64xf32>
    %c0_6 = arith.constant 0 : index
    %c0_7 = arith.constant 0 : index
    %8 = vector.load %arg8[%c0_6, %c0_7] : memref<16x64xf32, #tpu.memory_space<vmem>>, vector<16x64xf32>
    tpu.vector_store %arg8[%c0_6, %c0_7], %7 {strides = array<i32>} : memref<16x64xf32, #tpu.memory_space<vmem>>, vector<16x64xf32>,
    %c0_i32_8 = arith.constant 0 : i32
    %9 = arith.cmpi eq, %arg2, %c0_i32_8 : i32
    %10 = arith.extui %9 : i1 to i32
    %c0_i32_9 = arith.constant 0 : i32
    %11 = arith.cmpi ne, %10, %c0_i32_9 : i32
    scf.if %11 {
      %c0_10 = arith.constant 0 : index
      %c0_11 = arith.constant 0 : index
      %12 = vector.load %arg8[%c0_10, %c0_11] : memref<16x64xf32, #tpu.memory_space<vmem>>, vector<16x32xf32>
      %c0_12 = arith.constant 0 : index
      %c32 = arith.constant 32 : index
      %13 = vector.load %arg8[%c0_12, %c32] : memref<16x64xf32, #tpu.memory_space<vmem>>, vector<16x32xf32>
      %c0_13 = arith.constant 0 : index
      %c0_14 = arith.constant 0 : index
      %14 = memref.load %arg6[%c0_13, %c0_14] : memref<1x1xf32, #tpu.memory_space<smem>>
      %15 = vector.broadcast %14 : f32 to vector<16x32xf32>
      %16 = arith.mulf %15, %12 : vector<16x32xf32>
      %17 = arith.negf %16 : vector<16x32xf32>
      %18 = math.exp %17 : vector<16x32xf32>
      %cst_15 = arith.constant 1.000000e+00 : f32
      %19 = vector.broadcast %cst_15 : f32 to vector<16x32xf32>
      %20 = arith.addf %19, %18 : vector<16x32xf32>
      %21 = arith.divf %19, %20 : vector<16x32xf32>
      %22 = arith.mulf %12, %21 : vector<16x32xf32>
      %23 = arith.mulf %22, %13 : vector<16x32xf32>
      %c0_16 = arith.constant 0 : index
      %c0_17 = arith.constant 0 : index
      %24 = vector.load %arg7[%c0_16, %c0_17] : memref<16x32xf32, #tpu.memory_space<vmem>>, vector<16x32xf32>
      tpu.vector_store %arg7[%c0_16, %c0_17], %23 {strides = array<i32>} : memref<16x32xf32, #tpu.memory_space<vmem>>, vector<16x32xf32>,
    } else {
    }
    return
  }
  func.func @transform_0(%arg0: i32, %arg1: i32, %arg2: i32) -> (i32, i32) {
    %c0_i32 = arith.constant 0 : i32
    return %arg0, %arg2 : i32, i32
  }
  func.func @transform_1(%arg0: i32, %arg1: i32, %arg2: i32) -> (i32, i32) {
    %c0_i32 = arith.constant 0 : i32
    return %arg2, %arg1 : i32, i32
  }
  func.func @transform_2(%arg0: i32, %arg1: i32, %arg2: i32) -> (i32, i32) {
    %c0_i32 = arith.constant 0 : i32
    %c0_i32_0 = arith.constant 0 : i32
    return %c0_i32, %arg1 : i32, i32
  }
  func.func @transform_3(%arg0: i32, %arg1: i32, %arg2: i32) -> (i32, i32) {
    %c0_i32 = arith.constant 0 : i32
    %c0_i32_0 = arith.constant 0 : i32
    %c0_i32_1 = arith.constant 0 : i32
    return %c0_i32, %c0_i32_0 : i32, i32
  }
  func.func @transform_4(%arg0: i32, %arg1: i32, %arg2: i32) -> (i32, i32) {
    %c0_i32 = arith.constant 0 : i32
    return %arg0, %arg1 : i32, i32
  }
}

</mosaic_0001>

<llo_original>
// kernel: tpu_custom_call.1
$region0: #{tpu_custom_call.1}
  #allocation0 [shape = 'u32[]', space=smem, size = 0x4, offset = 0x4, fixed_abs, tag = 'smem constant byte address 0x4 - core index']
  #allocation1 [shape = 'u32[72,128]{1,0:T(1,128)}', space=vmem, size = 0x9000, scoped, tag = 'internal scratch']
  #allocation2 [shape = 'f32[16,64]{1,0:T(8,128)}', space=vmem, size = 0x2000, scoped, tag = 'scratch operand']
  #allocation3 [shape = 'f32[1,1]{1,0:T(1,128)S(6)}', space=smem, size = 0x200, scoped, tag = 'scoped memory for tpu_custom_call.1']
  %s0 = inlined_call_operand.hbm [shape: f32[16,32], index: 0, kind: input, shape index: {}]
  %s1 = inlined_call_operand.hbm [shape: f32[32,64], index: 1, kind: input, shape index: {}]
  %s2 = inlined_call_operand.vmem [shape: f32[1,64], index: 2, kind: input, shape index: {}]
  %s3 = inlined_call_operand.<no memory space> [shape: f32[1,1], index: 3, kind: input, shape index: {}]
  %s4 = inlined_call_operand.hbm [shape: f32[16,32], index: 4, kind: output, shape index: {}]
  %s5 = sld [smem:[#allocation0]]
  $region42: #{tpu_custom_call.1} parent=0
    _
  %s7 = ssub.s32 1, %s5
  %s8 = scalar_select 0, %s7, %s5
  %9 = sst [smem:[#allocation3]] %s3
  $region1: #{tpu_custom_call.1} parent=0
    #allocation4 [shape = 'u8[8192]{0}', space=vmem, size = 0x2000, scoped, tag = 'input window, operand 0, single buffered']
    #allocation5 [shape = 's32[1]{0}', space=sflag, size = 0x4, scoped, tag = 'scoped memory for tpu_custom_call.1']
    #allocation6 [shape = 's32[1]{0}', space=sflag, size = 0x4, scoped, tag = 'scoped memory for tpu_custom_call.1']
    #allocation7 [shape = 'u8[16384]{0}', space=vmem, size = 0x4000, scoped, tag = 'input window, operand 1, single buffered']
    #allocation8 [shape = 's32[1]{0}', space=sflag, size = 0x4, scoped, tag = 'scoped memory for tpu_custom_call.1']
    #allocation9 [shape = 'u8[8192]{0}', space=vmem, size = 0x2000, scoped, tag = 'output window, operand 0, single buffered']
    %10 = vsyncpa [#allocation5], 0
    %11 = vsyncpa [#allocation8], 0
    %12 = vsyncpa [#allocation6], 0
    // Predicated region
    $region2: #{tpu_custom_call.1} parent=1 // pred_check
      _
    $region3: #{tpu_custom_call.1} parent=1 // pred_check_branch
      %14 = sbr.rel (0) target = $region5
    $region4: #{tpu_custom_call.1} parent=1 // pred_region
      %16 = vsyncadd [#allocation5], 0
      %s17 = sshll.u32 %s0, 4
      %s18 = int_to_ptr.hbm [resolvable:$true] %s17
      %s19 = sshll.u32 [#allocation4], 4
      %s20 = int_to_ptr.vmem [resolvable:$true] %s19
      %25 = dma.hbm_to_vmem [thread:$0]  %s18, 256, %s20, [#allocation5], 128, 128, 8
    $region5: #{tpu_custom_call.1} parent=1 // pred_fallthru
      _
    // Predicated region
    $region6: #{tpu_custom_call.1} parent=1 // pred_check
      _
    $region7: #{tpu_custom_call.1} parent=1 // pred_check_branch
      %27 = sbr.rel (0) target = $region9
    $region8: #{tpu_custom_call.1} parent=1 // pred_region
      %29 = vsyncadd [#allocation8], 0
      %s30 = sshll.u32 %s1, 4
      %s31 = int_to_ptr.hbm [resolvable:$true] %s30
      %s32 = sshll.u32 [#allocation7], 4
      %s33 = int_to_ptr.vmem [resolvable:$true] %s32
      %38 = dma.hbm_to_vmem [thread:$0]  %s31, 512, %s33, [#allocation8], 128, 128, 8
    $region9: #{tpu_custom_call.1} parent=1 // pred_fallthru
      _
    // Predicated region
    $region10: #{tpu_custom_call.1} parent=1 // pred_check
      _
    $region11: #{tpu_custom_call.1} parent=1 // pred_check_branch
      %40 = sbr.rel (0) target = $region13
    $region12: #{tpu_custom_call.1} parent=1 // pred_region
      _
    $region13: #{tpu_custom_call.1} parent=1 // pred_fallthru
      _
    // Predicated region
    $region14: #{tpu_custom_call.1} parent=1 // pred_check
      _
    $region15: #{tpu_custom_call.1} parent=1 // pred_check_branch
      %42 = sbr.rel (0) target = $region17
    $region16: #{tpu_custom_call.1} parent=1 // pred_region
      _
    $region17: #{tpu_custom_call.1} parent=1 // pred_fallthru
      _
    // Predicated region
    $region18: #{tpu_custom_call.1} parent=1 // pred_check
      _
    $region19: #{tpu_custom_call.1} parent=1 // pred_check_branch
      %44 = sbr.rel (0) target = $region21
    $region20: #{tpu_custom_call.1} parent=1 // pred_region
      %46 = dma.done [#allocation5], 256
    $region21: #{tpu_custom_call.1} parent=1 // pred_fallthru
      _
    // Predicated region
    $region22: #{tpu_custom_call.1} parent=1 // pred_check
      _
    $region23: #{tpu_custom_call.1} parent=1 // pred_check_branch
      %48 = sbr.rel (0) target = $region25
    $region24: #{tpu_custom_call.1} parent=1 // pred_region
      %50 = dma.done [#allocation8], 512
    $region25: #{tpu_custom_call.1} parent=1 // pred_fallthru
      _
    %p51 = scmp.eq.s32.totalorder 0, 0
    // Predicated region
    $region26: #{tpu_custom_call.1} parent=1 // pred_check
      %p52 = pneg %p51
    $region27: #{tpu_custom_call.1} parent=1 // pred_check_branch
      %54 = sbr.rel (%p52) target = $region29
    $region28: #{tpu_custom_call.1} parent=1 // pred_region
      %v55 = vld [vmem:[%s2] sm:$0x1]
      %v57 = vperm.slane %v55, 0
      %vm59 = vcmask 523264
      %60 = vst.msk [vmem:[#allocation2] sm:$0xff] %vm59, %v57
      %61 = vst.msk [vmem:[#allocation2 + $0x8] sm:$0xff] %vm59, %v57
    $region29: #{tpu_custom_call.1} parent=1 // pred_fallthru
      _
    %v62 = vld [vmem:[#allocation2] sm:$0xff]
    %v63 = vld [vmem:[#allocation2 + $0x8] sm:$0xff]
    %v64 = vld [vmem:[#allocation4] sm:$0xff]
    %v65 = vld [vmem:[#allocation4 + $0x8] sm:$0xff]
    %v66 = vld [vmem:[#allocation7] sm:$0xff]
    %v67 = vld [vmem:[#allocation7 + $0x8] sm:$0xff]
    %v68 = vld [vmem:[#allocation7 + $0x10] sm:$0xff]
    %v69 = vld [vmem:[#allocation7 + $0x18] sm:$0xff]
    %vm70 = vcmask 261120
    %v72 = vsel %vm70, %v64, 0
    %v75 = vsel %vm70, %v65, 0
    %77 = vmatpush.msra.mxu0 0.0
    %78 = vmatpush.msra.mxu0 0.0
    %79 = vmatpush.msra.mxu0 0.0
    %80 = vmatpush.msra.mxu0 0.0
    %81 = vmatpush.msra.mxu0 0.0
    %82 = vmatpush.msra.mxu0 0.0
    %83 = vmatpush.msra.mxu0 0.0
    %84 = vmatpush.msra.mxu0 0.0
    %85 = vmatpush.msra.mxu0 0.0
    %86 = vmatpush.msra.mxu0 0.0
    %87 = vmatpush.msra.mxu0 0.0
    %88 = vmatpush.msra.mxu0 0.0
    %89 = vmatpush.msra.mxu0 %v69
    %90 = vmatpush.msra.mxu0 %v68
    %91 = vmatpush.msra.mxu0 %v67
    %92 = vmatpush.msra.mxu0 %v66
    %93 = vmatmul.f32.gmra.mxu0 %v72
    %v94 = vpop.f32.mrf.mxu0
    %v95 = vadd.f32 0.0, %v94
    %96 = vmatmul.f32.gmra.mxu0 %v75
    %v97 = vpop.f32.mrf.mxu0
    %v98 = vadd.f32 0.0, %v97
    %99 = vdwg.mxu0
    %v100 = vadd.f32 %v62, %v95
    %v101 = vadd.f32 %v63, %v98
    %vm102 = vcmask 523264
    %103 = vst.msk [vmem:[#allocation2] sm:$0xff] %vm102, %v100
    %104 = vst.msk [vmem:[#allocation2 + $0x8] sm:$0xff] %vm102, %v101
    // Predicated region
    $region30: #{tpu_custom_call.1} parent=1 // pred_check
      %p105 = pneg %p51
    $region31: #{tpu_custom_call.1} parent=1 // pred_check_branch
      %107 = sbr.rel (%p105) target = $region33
    $region32: #{tpu_custom_call.1} parent=1 // pred_region
      %v108 = vld [vmem:[#allocation2] sm:$0xff]
      %v109 = vld [vmem:[#allocation2 + $0x8] sm:$0xff]
      %s110 = sld [smem:[#allocation3]]
      %v111 = vstv %s110
      %v112 = vmul.f32 %v111, %v108
      %v113 = vmul.f32 %v111, %v109
      %v114 = vxor.u32 %v112, 2147483648
      %v115 = vxor.u32 %v113, 2147483648
      %v116 = vmul.f32 %v114, 1.442695
      %v117 = vpow.pop %v116
      %v118 = vmul.f32 %v115, 1.442695
      %v119 = vpow.pop %v118
      %v120 = vadd.f32 %v117, 1.0
      %v121 = vadd.f32 %v119, 1.0
      %v122 = vrcp.pop %v120
      %v123 = vmul.f32 %v120, %v122
      %v124 = vsub.f32 1.0, %v123
      %v125 = vmul.f32 %v122, %v124
      %v126 = vadd.f32 %v122, %v125
      %vm127 = vweird.f32 %v120
      %vm128 = vweird.f32 %v122
      %vm129 = vmor %vm127, %vm128
      %v130 = vsel %vm129, %v122, %v126
      %v131 = vand.u32 2147483647, %v120
      %vm132 = vcmp.eq.f32.partialorder %v131, 8.507059e+37
      %v133 = vand.u32 %v120, 2147483648
      %v134 = vor.u32 1.1754944e-38, %v133
      %v135 = vsel %vm132, %v134, %v130
      %v136 = vmul.f32 1.0, %v135
      %v137 = vrcp.pop %v121
      %v138 = vmul.f32 %v121, %v137
      %v139 = vsub.f32 1.0, %v138
      %v140 = vmul.f32 %v137, %v139
      %v141 = vadd.f32 %v137, %v140
      %vm142 = vweird.f32 %v121
      %vm143 = vweird.f32 %v137
      %vm144 = vmor %vm142, %vm143
      %v145 = vsel %vm144, %v137, %v141
      %v146 = vand.u32 2147483647, %v121
      %vm147 = vcmp.eq.f32.partialorder %v146, 8.507059e+37
      %v148 = vand.u32 %v121, 2147483648
      %v149 = vor.u32 1.1754944e-38, %v148
      %v150 = vsel %vm147, %v149, %v145
      %v151 = vmul.f32 1.0, %v150
      %v152 = vmul.f32 %v108, %v136
      %v153 = vmul.f32 %v109, %v151
      %156 = vrot.lane.b32.xlu0 %v108, 96
      %v157 = vpop.permute.xlu0 %156
      %158 = vrot.lane.b32.xlu0 %v109, 96
      %v159 = vpop.permute.xlu0 %158
      %v162 = vmul.f32 %v152, %v157
      %v163 = vmul.f32 %v153, %v159
      %164 = vst.msk [vmem:[#allocation9] sm:$0xff] %vm70, %v162
      %165 = vst.msk [vmem:[#allocation9 + $0x8] sm:$0xff] %vm70, %v163
    $region33: #{tpu_custom_call.1} parent=1 // pred_fallthru
      _
    // Predicated region
    $region34: #{tpu_custom_call.1} parent=1 // pred_check
      _
    $region35: #{tpu_custom_call.1} parent=1 // pred_check_branch
      %167 = sbr.rel (0) target = $region37
    $region36: #{tpu_custom_call.1} parent=1 // pred_region
      %169 = vsyncadd [#allocation6], 0
      %s170 = sshll.u32 [#allocation9], 4
      %s171 = int_to_ptr.vmem [resolvable:$true] %s170
      %s172 = sshll.u32 %s4, 4
      %s173 = int_to_ptr.hbm [resolvable:$true] %s172
      %178 = dma.vmem_to_hbm [thread:$0]  %s171, 256, %s173, [#allocation6], 128, 128, 8
    $region37: #{tpu_custom_call.1} parent=1 // pred_fallthru
      _
    // Predicated region
    $region38: #{tpu_custom_call.1} parent=1 // pred_check
      _
    $region39: #{tpu_custom_call.1} parent=1 // pred_check_branch
      %180 = sbr.rel (0) target = $region41
    $region40: #{tpu_custom_call.1} parent=1 // pred_region
      %182 = dma.done [#allocation6], 256
    $region41: #{tpu_custom_call.1} parent=1 // pred_fallthru
      _
    %183 = vsyncpa [#allocation5], 1
    %184 = vsyncpa [#allocation8], 1
    %185 = vsyncpa [#allocation6], 1

</llo_original>
